<compile_context>
chip_gen: v7x
topology: tpu7x:2x2x1
jax: 0.10.0
libtpu: 0.0.40
codegen_flags: <defaults>
</compile_context>

<pallas_src>
import jax
import jax.numpy as jnp
from jax.experimental import pallas as pl
from jax.experimental.pallas import tpu as pltpu


def _round_up(v, m):
    return ((v + m - 1) // m) * m


def _pad2(a, rows, cols):
    return jnp.pad(a, ((0, rows - a.shape[0]), (0, cols - a.shape[1])))


def _sigmoid(z):
    # sigmoid(z) == 0.5 * tanh(0.5 z) + 0.5 : one EUP transcendental per element.
    return 0.5 * jnp.tanh(0.5 * z) + 0.5


def _odb_kernel(x_ref, w1_ref, b1_ref, w2t_ref, b2_ref,
                w3t_ref, b3_ref, w4_ref, c_ref, out_ref):
    # Layer 1 in natural orientation: (TN, d) @ (d, Mp) + (1, Mp)
    a1 = jnp.dot(x_ref[...], w1_ref[...], preferred_element_type=jnp.float32)
    # One aligned transpose -> batch on lanes for the rest of the network.
    h = _sigmoid(a1 + b1_ref[...]).T                      # (Mp, TN)
    # Layers 2, 3: (Mp, Mp) @ (Mp, TN) + (Mp, 1)
    h = _sigmoid(jnp.dot(w2t_ref[...], h, preferred_element_type=jnp.float32)
                 + b2_ref[...])
    h = _sigmoid(jnp.dot(w3t_ref[...], h, preferred_element_type=jnp.float32)
                 + b3_ref[...])
    # Layer 4: VPU multiply + sublane reduction instead of a 1-wide MXU matmul,
    # plus the folded (b4 + K/2) scalar from SMEM.  Result is lane-dense (1, TN).
    out = jnp.sum(h * w4_ref[...], axis=0, keepdims=True) + c_ref[0]
    out_ref[...] = out.astype(out_ref.dtype)


def odb_forward(x, params, K, *, block_n=512):
    """ODB forward pass.

    x:       (N, d) float32
    params:  dict with w1,b1,w2,b2,w3,b3,w4,b4,bi  (weights stored (in, out))
    returns: (g, b) with g of shape (N, 1), b of shape (K,)
    """
    N, d = x.shape
    M = params["w1"].shape[1]

    M_pad = _round_up(M, 128)                       # full-lane hidden width
    TN = _round_up(min(block_n, _round_up(N, 128)), 128)
    N_pad = _round_up(N, TN)
    num_blocks = N_pad // TN

    x_p = jnp.pad(x, ((0, N_pad - N), (0, 0))) if N_pad != N else x

    # Zero-padded / pre-transposed parameters (tiny, one-off host-side work).
    w1_p = _pad2(params["w1"], d, M_pad)            # (d, Mp)
    b1_p = _pad2(params["b1"], 1, M_pad)            # (1, Mp) row
    w2t_p = _pad2(params["w2"].T, M_pad, M_pad)     # (Mp, Mp)
    b2_p = _pad2(params["b2"].T, M_pad, 1)          # (Mp, 1) column
    w3t_p = _pad2(params["w3"].T, M_pad, M_pad)     # (Mp, Mp)
    b3_p = _pad2(params["b3"].T, M_pad, 1)          # (Mp, 1) column
    w4_p = _pad2(params["w4"], M_pad, 1)            # (Mp, 1) column
    # Fold final bias and K/2 into one scalar carried in SMEM.
    c = (params["b4"].reshape((1,)) + jnp.float32(K / 2.0)).astype(jnp.float32)

    const = lambda shape: pl.BlockSpec(shape, lambda i: (0, 0))

    out = pl.pallas_call(
        _odb_kernel,
        out_shape=jax.ShapeDtypeStruct((1, N_pad), jnp.float32),
        grid=(num_blocks,),
        in_specs=[
            pl.BlockSpec((TN, d), lambda i: (i, 0)),          # x tile
            const((d, M_pad)), const((1, M_pad)),             # w1, b1
            const((M_pad, M_pad)), const((M_pad, 1)),         # w2^T, b2
            const((M_pad, M_pad)), const((M_pad, 1)),         # w3^T, b3
            const((M_pad, 1)),                                # w4 column
            pl.BlockSpec(memory_space=pltpu.MemorySpace.SMEM),  # b4 + K/2 scalar
        ],
        out_specs=pl.BlockSpec((1, TN), lambda i: (0, i)),    # lane-dense output
        compiler_params=pltpu.CompilerParams(
            dimension_semantics=("parallel",),
            vmem_limit_bytes=32 * 1024 * 1024),
    )(x_p, w1_p, b1_p, w2t_p, b2_p, w3t_p, b3_p, w4_p, c)

    g = out[0, :N].reshape(N, 1)
    # b = concat([0], bi): pure parameter plumbing, no compute -> plain JAX glue.
    b = jnp.concatenate([jnp.zeros((1,), jnp.float32), params["bi"]])
    return g, b


def init_params(key, d, M, K):
    """Deterministic init mirroring nn.Linear default (uniform +/- 1/sqrt(fan_in))."""
    def linear(key, fan_in, fan_out):
        kw, kb = jax.random.split(key)
        bound = 1.0 / jnp.sqrt(jnp.float32(fan_in))
        w = jax.random.uniform(kw, (fan_in, fan_out), jnp.float32, -bound, bound)
        b = jax.random.uniform(kb, (1, fan_out), jnp.float32, -bound, bound)
        return w, b

    k1, k2, k3, k4 = jax.random.split(key, 4)
    w1, b1 = linear(k1, d, M)
    w2, b2 = linear(k2, M, M)
    w3, b3 = linear(k3, M, M)
    w4, b4 = linear(k4, M, 1)
    bi = jnp.arange(1, K, dtype=jnp.float32)      # torch.arange(1, K).float()
    return dict(w1=w1, b1=b1, w2=w2, b2=b2, w3=w3, b3=b3, w4=w4, b4=b4, bi=bi)


def odb_reference(x, params, K):
    """Plain-JAX reference for correctness checking."""
    g = jax.nn.sigmoid(x @ params["w1"] + params["b1"])
    g = jax.nn.sigmoid(g @ params["w2"] + params["b2"])
    g = jax.nn.sigmoid(g @ params["w3"] + params["b3"])
    g = g @ params["w4"] + params["b4"] + K / 2.0
    b = jnp.concatenate([jnp.zeros((1,), jnp.float32), params["bi"]])
    return g, b


if __name__ == "__main__":
    d, M, K = 16, 32, 5
    N = 8

    key = jax.random.PRNGKey(0)
    kx, kp = jax.random.split(key)
    x = jax.random.normal(kx, (N, d), jnp.float32)
    params = init_params(kp, d, M, K)

    # Single-tile case.
    g, b = odb_forward(x, params, K)
    g = jax.block_until_ready(g)
    b = jax.block_until_ready(b)

    g_ref, b_ref = odb_reference(x, params, K)
    assert g.shape == (N, 1) and b.shape == (K,)
    assert jnp.allclose(g, g_ref, atol=5e-5, rtol=5e-5)
    assert jnp.allclose(b, b_ref)

    # Multi-tile case: exercises the parallel grid axis and the padded tail.
    N2 = 300
    x2 = jax.random.normal(jax.random.PRNGKey(1), (N2, d), jnp.float32)
    g2, b2 = odb_forward(x2, params, K, block_n=128)
    g2 = jax.block_until_ready(g2)
    g2_ref, _ = odb_reference(x2, params, K)
    assert g2.shape == (N2, 1)
    assert jnp.allclose(g2, g2_ref, atol=5e-5, rtol=5e-5)

    print("KERNEL_OK")
</pallas_src>

<mosaic_0001>
module attributes {stable_mosaic.version = 11 : i64} {
  func.func @_odb_kernel(%arg0: i32, %arg1: memref<128x16xf32, #tpu.memory_space<vmem>>, %arg2: memref<16x128xf32, #tpu.memory_space<vmem>>, %arg3: memref<1x128xf32, #tpu.memory_space<vmem>>, %arg4: memref<128x128xf32, #tpu.memory_space<vmem>>, %arg5: memref<128x1xf32, #tpu.memory_space<vmem>>, %arg6: memref<128x128xf32, #tpu.memory_space<vmem>>, %arg7: memref<128x1xf32, #tpu.memory_space<vmem>>, %arg8: memref<128x1xf32, #tpu.memory_space<vmem>>, %arg9: memref<1xf32, #tpu.memory_space<smem>>, %arg10: memref<1x128xf32, #tpu.memory_space<vmem>>) attributes {dimension_semantics = [#tpu.dimension_semantics<parallel>], iteration_bounds = array<i64: 1>, scalar_prefetch = 0 : i64, scratch_operands = 0 : i64, tpu.core_type = #tpu.core_type<tc>, window_params = [{transform_indices = @transform_0, window_bounds = array<i64: 128, 16>}, {pipeline_mode = #tpu.pipeline_mode<synchronous>, transform_indices = @transform_1, window_bounds = array<i64: 16, 128>}, {pipeline_mode = #tpu.pipeline_mode<synchronous>, transform_indices = @transform_2, window_bounds = array<i64: 1, 128>}, {pipeline_mode = #tpu.pipeline_mode<synchronous>, transform_indices = @transform_3, window_bounds = array<i64: 128, 128>}, {pipeline_mode = #tpu.pipeline_mode<synchronous>, transform_indices = @transform_4, window_bounds = array<i64: 128, 1>}, {pipeline_mode = #tpu.pipeline_mode<synchronous>, transform_indices = @transform_5, window_bounds = array<i64: 128, 128>}, {pipeline_mode = #tpu.pipeline_mode<synchronous>, transform_indices = @transform_6, window_bounds = array<i64: 128, 1>}, {pipeline_mode = #tpu.pipeline_mode<synchronous>, transform_indices = @transform_7, window_bounds = array<i64: 128, 1>}, {transform_indices = @transform_8, window_bounds = array<i64: 1>}, {transform_indices = @transform_9, window_bounds = array<i64: 1, 128>}]} {
    %c0 = arith.constant 0 : index
    %c0_0 = arith.constant 0 : index
    %0 = vector.load %arg1[%c0, %c0_0] : memref<128x16xf32, #tpu.memory_space<vmem>>, vector<128x16xf32>
    %c0_1 = arith.constant 0 : index
    %c0_2 = arith.constant 0 : index
    %1 = vector.load %arg2[%c0_1, %c0_2] : memref<16x128xf32, #tpu.memory_space<vmem>>, vector<16x128xf32>
    %cst = arith.constant dense<0.000000e+00> : vector<128x128xf32>
    %2 = tpu.matmul %0, %1, %cst {dimension_numbers = #tpu.dot_dimension_numbers<[1], [0], [0], [1], [0, 0, 1, 1], [], []>} : vector<128x16xf32>, vector<16x128xf32>, vector<128x128xf32> -> vector<128x128xf32>
    %c0_3 = arith.constant 0 : index
    %c0_4 = arith.constant 0 : index
    %3 = vector.load %arg3[%c0_3, %c0_4] : memref<1x128xf32, #tpu.memory_space<vmem>>, vector<1x128xf32>
    %4 = vector.broadcast %3 : vector<1x128xf32> to vector<128x128xf32>
    %5 = arith.addf %2, %4 : vector<128x128xf32>
    %cst_5 = arith.constant 5.000000e-01 : f32
    %6 = vector.broadcast %cst_5 : f32 to vector<128x128xf32>
    %7 = arith.mulf %6, %5 : vector<128x128xf32>
    %8 = math.tanh %7 : vector<128x128xf32>
    %cst_6 = arith.constant 5.000000e-01 : f32
    %9 = vector.broadcast %cst_6 : f32 to vector<128x128xf32>
    %10 = arith.mulf %9, %8 : vector<128x128xf32>
    %cst_7 = arith.constant 5.000000e-01 : f32
    %11 = vector.broadcast %cst_7 : f32 to vector<128x128xf32>
    %12 = arith.addf %10, %11 : vector<128x128xf32>
    %13 = tpu.transpose %12, [1, 0] : vector<128x128xf32> -> vector<128x128xf32>
    %c0_8 = arith.constant 0 : index
    %c0_9 = arith.constant 0 : index
    %14 = vector.load %arg4[%c0_8, %c0_9] : memref<128x128xf32, #tpu.memory_space<vmem>>, vector<128x128xf32>
    %cst_10 = arith.constant dense<0.000000e+00> : vector<128x128xf32>
    %15 = tpu.matmul %14, %13, %cst_10 {dimension_numbers = #tpu.dot_dimension_numbers<[1], [0], [0], [1], [0, 0, 1, 1], [], []>} : vector<128x128xf32>, vector<128x128xf32>, vector<128x128xf32> -> vector<128x128xf32>
    %c0_11 = arith.constant 0 : index
    %c0_12 = arith.constant 0 : index
    %16 = vector.load %arg5[%c0_11, %c0_12] : memref<128x1xf32, #tpu.memory_space<vmem>>, vector<128x1xf32>
    %17 = vector.broadcast %16 : vector<128x1xf32> to vector<128x128xf32>
    %18 = arith.addf %15, %17 : vector<128x128xf32>
    %cst_13 = arith.constant 5.000000e-01 : f32
    %19 = vector.broadcast %cst_13 : f32 to vector<128x128xf32>
    %20 = arith.mulf %19, %18 : vector<128x128xf32>
    %21 = math.tanh %20 : vector<128x128xf32>
    %cst_14 = arith.constant 5.000000e-01 : f32
    %22 = vector.broadcast %cst_14 : f32 to vector<128x128xf32>
    %23 = arith.mulf %22, %21 : vector<128x128xf32>
    %cst_15 = arith.constant 5.000000e-01 : f32
    %24 = vector.broadcast %cst_15 : f32 to vector<128x128xf32>
    %25 = arith.addf %23, %24 : vector<128x128xf32>
    %c0_16 = arith.constant 0 : index
    %c0_17 = arith.constant 0 : index
    %26 = vector.load %arg6[%c0_16, %c0_17] : memref<128x128xf32, #tpu.memory_space<vmem>>, vector<128x128xf32>
    %cst_18 = arith.constant dense<0.000000e+00> : vector<128x128xf32>
    %27 = tpu.matmul %26, %25, %cst_18 {dimension_numbers = #tpu.dot_dimension_numbers<[1], [0], [0], [1], [0, 0, 1, 1], [], []>} : vector<128x128xf32>, vector<128x128xf32>, vector<128x128xf32> -> vector<128x128xf32>
    %c0_19 = arith.constant 0 : index
    %c0_20 = arith.constant 0 : index
    %28 = vector.load %arg7[%c0_19, %c0_20] : memref<128x1xf32, #tpu.memory_space<vmem>>, vector<128x1xf32>
    %29 = vector.broadcast %28 : vector<128x1xf32> to vector<128x128xf32>
    %30 = arith.addf %27, %29 : vector<128x128xf32>
    %cst_21 = arith.constant 5.000000e-01 : f32
    %31 = vector.broadcast %cst_21 : f32 to vector<128x128xf32>
    %32 = arith.mulf %31, %30 : vector<128x128xf32>
    %33 = math.tanh %32 : vector<128x128xf32>
    %cst_22 = arith.constant 5.000000e-01 : f32
    %34 = vector.broadcast %cst_22 : f32 to vector<128x128xf32>
    %35 = arith.mulf %34, %33 : vector<128x128xf32>
    %cst_23 = arith.constant 5.000000e-01 : f32
    %36 = vector.broadcast %cst_23 : f32 to vector<128x128xf32>
    %37 = arith.addf %35, %36 : vector<128x128xf32>
    %c0_24 = arith.constant 0 : index
    %c0_25 = arith.constant 0 : index
    %38 = vector.load %arg8[%c0_24, %c0_25] : memref<128x1xf32, #tpu.memory_space<vmem>>, vector<128x1xf32>
    %39 = vector.broadcast %38 : vector<128x1xf32> to vector<128x128xf32>
    %40 = arith.mulf %37, %39 : vector<128x128xf32>
    %cst_26 = arith.constant dense<0.000000e+00> : vector<128xf32>
    %41 = vector.multi_reduction <add>, %40, %cst_26 [0] : vector<128x128xf32> to vector<128xf32>
    %42 = vector.shape_cast %41 : vector<128xf32> to vector<1x128xf32>
    %c0_27 = arith.constant 0 : index
    %43 = memref.load %arg9[%c0_27] : memref<1xf32, #tpu.memory_space<smem>>
    %44 = vector.broadcast %43 : f32 to vector<1x128xf32>
    %45 = arith.addf %42, %44 : vector<1x128xf32>
    %c0_28 = arith.constant 0 : index
    %c0_29 = arith.constant 0 : index
    %46 = vector.load %arg10[%c0_28, %c0_29] : memref<1x128xf32, #tpu.memory_space<vmem>>, vector<1x128xf32>
    tpu.vector_store %arg10[%c0_28, %c0_29], %45 {strides = array<i32>} : memref<1x128xf32, #tpu.memory_space<vmem>>, vector<1x128xf32>,
    return
  }
  func.func @transform_0(%arg0: i32) -> (i32, i32) {
    %c0_i32 = arith.constant 0 : i32
    %c0_i32_0 = arith.constant 0 : i32
    return %arg0, %c0_i32 : i32, i32
  }
  func.func @transform_1(%arg0: i32) -> (i32, i32) {
    %c0_i32 = arith.constant 0 : i32
    %c0_i32_0 = arith.constant 0 : i32
    %c0_i32_1 = arith.constant 0 : i32
    return %c0_i32, %c0_i32_0 : i32, i32
  }
  func.func @transform_2(%arg0: i32) -> (i32, i32) {
    %c0_i32 = arith.constant 0 : i32
    %c0_i32_0 = arith.constant 0 : i32
    %c0_i32_1 = arith.constant 0 : i32
    return %c0_i32, %c0_i32_0 : i32, i32
  }
  func.func @transform_3(%arg0: i32) -> (i32, i32) {
    %c0_i32 = arith.constant 0 : i32
    %c0_i32_0 = arith.constant 0 : i32
    %c0_i32_1 = arith.constant 0 : i32
    return %c0_i32, %c0_i32_0 : i32, i32
  }
  func.func @transform_4(%arg0: i32) -> (i32, i32) {
    %c0_i32 = arith.constant 0 : i32
    %c0_i32_0 = arith.constant 0 : i32
    %c0_i32_1 = arith.constant 0 : i32
    return %c0_i32, %c0_i32_0 : i32, i32
  }
  func.func @transform_5(%arg0: i32) -> (i32, i32) {
    %c0_i32 = arith.constant 0 : i32
    %c0_i32_0 = arith.constant 0 : i32
    %c0_i32_1 = arith.constant 0 : i32
    return %c0_i32, %c0_i32_0 : i32, i32
  }
  func.func @transform_6(%arg0: i32) -> (i32, i32) {
    %c0_i32 = arith.constant 0 : i32
    %c0_i32_0 = arith.constant 0 : i32
    %c0_i32_1 = arith.constant 0 : i32
    return %c0_i32, %c0_i32_0 : i32, i32
  }
  func.func @transform_7(%arg0: i32) -> (i32, i32) {
    %c0_i32 = arith.constant 0 : i32
    %c0_i32_0 = arith.constant 0 : i32
    %c0_i32_1 = arith.constant 0 : i32
    return %c0_i32, %c0_i32_0 : i32, i32
  }
  func.func @transform_8(%arg0: i32) -> i32 {
    %c0_i32 = arith.constant 0 : i32
    %c0_i32_0 = arith.constant 0 : i32
    return %c0_i32 : i32
  }
  func.func @transform_9(%arg0: i32) -> (i32, i32) {
    %c0_i32 = arith.constant 0 : i32
    %c0_i32_0 = arith.constant 0 : i32
    return %c0_i32, %arg0 : i32, i32
  }
}

</mosaic_0001>

<llo_original>
// kernel: tpu_custom_call.1
$region0: #{tpu_custom_call.1}
  #allocation0 [shape = 'u32[]', space=smem, size = 0x4, offset = 0x4, fixed_abs, tag = 'smem constant byte address 0x4 - core index']
  #allocation1 [shape = 'u32[144,128]{1,0:T(1,128)}', space=vmem, size = 0x12000, scoped, tag = 'internal scratch']
  #allocation2 [shape = 'f32[1]{0:T(128)S(6)}', space=smem, size = 0x200, scoped, tag = 'scoped memory for tpu_custom_call.1']
  %s0 = inlined_call_operand.vmem [shape: f32[128,16], index: 0, kind: input, shape index: {}]
  %s1 = inlined_call_operand.vmem [shape: f32[16,128], index: 1, kind: input, shape index: {}]
  %s2 = inlined_call_operand.vmem [shape: f32[1,128], index: 2, kind: input, shape index: {}]
  %s3 = inlined_call_operand.vmem [shape: f32[128,128], index: 3, kind: input, shape index: {}]
  %s4 = inlined_call_operand.vmem [shape: f32[128,1], index: 4, kind: input, shape index: {}]
  %s5 = inlined_call_operand.vmem [shape: f32[128,128], index: 5, kind: input, shape index: {}]
  %s6 = inlined_call_operand.vmem [shape: f32[128,1], index: 6, kind: input, shape index: {}]
  %s7 = inlined_call_operand.vmem [shape: f32[128,1], index: 7, kind: input, shape index: {}]
  %s8 = inlined_call_operand.<no memory space> [shape: f32[1], index: 8, kind: input, shape index: {}]
  %s9 = inlined_call_operand.hbm [shape: f32[1,128], index: 9, kind: output, shape index: {}]
  %s10 = sld [smem:[#allocation0]]
  $region46: #{tpu_custom_call.1} parent=0
    _
  %s12 = ssub.s32 1, %s10
  %s13 = scalar_select 0, %s12, %s10
  %14 = sst [smem:[#allocation2]] %s8
  $region1: #{tpu_custom_call.1} parent=0
    #allocation3 [shape = 'u8[512]{0}', space=vmem, size = 0x400, scoped, tag = 'output window, operand 0, single buffered']
    #allocation4 [shape = 's32[1]{0}', space=sflag, size = 0x4, scoped, tag = 'scoped memory for tpu_custom_call.1']
    %15 = vsyncpa [#allocation4], 0
    // Predicated region
    $region2: #{tpu_custom_call.1} parent=1 // pred_check
      _
    $region3: #{tpu_custom_call.1} parent=1 // pred_check_branch
      %17 = sbr.rel (0) target = $region5
    $region4: #{tpu_custom_call.1} parent=1 // pred_region
      _
    $region5: #{tpu_custom_call.1} parent=1 // pred_fallthru
      _
    // Predicated region
    $region6: #{tpu_custom_call.1} parent=1 // pred_check
      _
    $region7: #{tpu_custom_call.1} parent=1 // pred_check_branch
      %19 = sbr.rel (0) target = $region9
    $region8: #{tpu_custom_call.1} parent=1 // pred_region
      _
    $region9: #{tpu_custom_call.1} parent=1 // pred_fallthru
      _
    // Predicated region
    $region10: #{tpu_custom_call.1} parent=1 // pred_check
      _
    $region11: #{tpu_custom_call.1} parent=1 // pred_check_branch
      %21 = sbr.rel (0) target = $region13
    $region12: #{tpu_custom_call.1} parent=1 // pred_region
      _
    $region13: #{tpu_custom_call.1} parent=1 // pred_fallthru
      _
    // Predicated region
    $region14: #{tpu_custom_call.1} parent=1 // pred_check
      _
    $region15: #{tpu_custom_call.1} parent=1 // pred_check_branch
      %23 = sbr.rel (0) target = $region17
    $region16: #{tpu_custom_call.1} parent=1 // pred_region
      _
    $region17: #{tpu_custom_call.1} parent=1 // pred_fallthru
      _
    // Predicated region
    $region18: #{tpu_custom_call.1} parent=1 // pred_check
      _
    $region19: #{tpu_custom_call.1} parent=1 // pred_check_branch
      %25 = sbr.rel (0) target = $region21
    $region20: #{tpu_custom_call.1} parent=1 // pred_region
      _
    $region21: #{tpu_custom_call.1} parent=1 // pred_fallthru
      _
    // Predicated region
    $region22: #{tpu_custom_call.1} parent=1 // pred_check
      _
    $region23: #{tpu_custom_call.1} parent=1 // pred_check_branch
      %27 = sbr.rel (0) target = $region25
    $region24: #{tpu_custom_call.1} parent=1 // pred_region
      _
    $region25: #{tpu_custom_call.1} parent=1 // pred_fallthru
      _
    // Predicated region
    $region26: #{tpu_custom_call.1} parent=1 // pred_check
      _
    $region27: #{tpu_custom_call.1} parent=1 // pred_check_branch
      %29 = sbr.rel (0) target = $region29
    $region28: #{tpu_custom_call.1} parent=1 // pred_region
      _
    $region29: #{tpu_custom_call.1} parent=1 // pred_fallthru
      _
    // Predicated region
    $region30: #{tpu_custom_call.1} parent=1 // pred_check
      _
    $region31: #{tpu_custom_call.1} parent=1 // pred_check_branch
      %31 = sbr.rel (0) target = $region33
    $region32: #{tpu_custom_call.1} parent=1 // pred_region
      _
    $region33: #{tpu_custom_call.1} parent=1 // pred_fallthru
      _
    // Predicated region
    $region34: #{tpu_custom_call.1} parent=1 // pred_check
      _
    $region35: #{tpu_custom_call.1} parent=1 // pred_check_branch
      %33 = sbr.rel (0) target = $region37
    $region36: #{tpu_custom_call.1} parent=1 // pred_region
      _
    $region37: #{tpu_custom_call.1} parent=1 // pred_fallthru
      _
    %v34 = vld [vmem:[%s0] sm:$0xff]
    %v35 = vld [vmem:[%s0 + $0x8] sm:$0xff]
    %v36 = vld [vmem:[%s0 + $0x10] sm:$0xff]
    %v37 = vld [vmem:[%s0 + $0x18] sm:$0xff]
    %v38 = vld [vmem:[%s0 + $0x20] sm:$0xff]
    %v39 = vld [vmem:[%s0 + $0x28] sm:$0xff]
    %v40 = vld [vmem:[%s0 + $0x30] sm:$0xff]
    %v41 = vld [vmem:[%s0 + $0x38] sm:$0xff]
    %v42 = vld [vmem:[%s0 + $0x40] sm:$0xff]
    %v43 = vld [vmem:[%s0 + $0x48] sm:$0xff]
    %v44 = vld [vmem:[%s0 + $0x50] sm:$0xff]
    %v45 = vld [vmem:[%s0 + $0x58] sm:$0xff]
    %v46 = vld [vmem:[%s0 + $0x60] sm:$0xff]
    %v47 = vld [vmem:[%s0 + $0x68] sm:$0xff]
    %v48 = vld [vmem:[%s0 + $0x70] sm:$0xff]
    %v49 = vld [vmem:[%s0 + $0x78] sm:$0xff]
    %v50 = vld [vmem:[%s1] sm:$0xff]
    %v51 = vld [vmem:[%s1 + $0x8] sm:$0xff]
    %v52 = vld [vmem:[%s2] sm:$0x1]
    %v54 = vlaneseq
    %v55 = vshrl.u32 %v54, 7
    %v56 = vsub.s32 0, %v55
    %v57 = vrot.slane %v52, %v56
    %vm59 = vcmask 130048
    %v61 = vsel %vm59, %v34, 0
    %v64 = vsel %vm59, %v35, 0
    %v67 = vsel %vm59, %v36, 0
    %v70 = vsel %vm59, %v37, 0
    %v73 = vsel %vm59, %v38, 0
    %v76 = vsel %vm59, %v39, 0
    %v79 = vsel %vm59, %v40, 0
    %v82 = vsel %vm59, %v41, 0
    %v85 = vsel %vm59, %v42, 0
    %v88 = vsel %vm59, %v43, 0
    %v91 = vsel %vm59, %v44, 0
    %v94 = vsel %vm59, %v45, 0
    %v97 = vsel %vm59, %v46, 0
    %v100 = vsel %vm59, %v47, 0
    %v103 = vsel %vm59, %v48, 0
    %v106 = vsel %vm59, %v49, 0
    %108 = vmatprep.subr.mxu0 0.0
    %109 = vmatpush1.msra.mxu0 %v50
    %110 = vmatprep.subr.mxu0 0.0
    %111 = vmatpush1.msra.mxu0 %v51
    %112 = vmatprep.subr.mxu0 0.0
    %113 = vmatpush1.msra.mxu0 0.0
    %114 = vmatprep.subr.mxu0 0.0
    %115 = vmatpush1.msra.mxu0 0.0
    %116 = vmatprep.subr.mxu0 0.0
    %117 = vmatpush1.msra.mxu0 0.0
    %118 = vmatprep.subr.mxu0 0.0
    %119 = vmatpush1.msra.mxu0 0.0
    %120 = vmatprep.subr.mxu0 0.0
    %121 = vmatpush1.msra.mxu0 0.0
    %122 = vmatprep.subr.mxu0 0.0
    %123 = vmatpush1.msra.mxu0 0.0
    %124 = vmatprep.subr.mxu0 0.0
    %125 = vmatpush1.msra.mxu0 0.0
    %126 = vmatprep.subr.mxu0 0.0
    %127 = vmatpush1.msra.mxu0 0.0
    %128 = vmatprep.subr.mxu0 0.0
    %129 = vmatpush1.msra.mxu0 0.0
    %130 = vmatprep.subr.mxu0 0.0
    %131 = vmatpush1.msra.mxu0 0.0
    %132 = vmatprep.subr.mxu0 0.0
    %133 = vmatpush1.msra.mxu0 0.0
    %134 = vmatprep.subr.mxu0 0.0
    %135 = vmatpush1.msra.mxu0 0.0
    %136 = vmatprep.subr.mxu0 0.0
    %137 = vmatpush1.msra.mxu0 0.0
    %138 = vmatprep.subr.mxu0 0.0
    %139 = vmatpush1.msra.mxu0 0.0
    %140 = vmatprep.subr.mxu0 0.0
    %141 = vmatpush1.msra.mxu0 0.0
    %142 = vmatprep.subr.mxu0 0.0
    %143 = vmatpush1.msra.mxu0 0.0
    %144 = vmatprep.subr.mxu0 0.0
    %145 = vmatpush1.msra.mxu0 0.0
    %146 = vmatprep.subr.mxu0 0.0
    %147 = vmatpush1.msra.mxu0 0.0
    %148 = vmatprep.subr.mxu0 0.0
    %149 = vmatpush1.msra.mxu0 0.0
    %150 = vmatprep.subr.mxu0 0.0
    %151 = vmatpush1.msra.mxu0 0.0
    %152 = vmatprep.subr.mxu0 0.0
    %153 = vmatpush1.msra.mxu0 0.0
    %154 = vmatprep.subr.mxu0 0.0
    %155 = vmatpush1.msra.mxu0 0.0
    %156 = vmatprep.subr.mxu0 0.0
    %157 = vmatpush1.msra.mxu0 0.0
    %158 = vmatprep.subr.mxu0 0.0
    %159 = vmatpush1.msra.mxu0 0.0
    %160 = vmatprep.subr.mxu0 0.0
    %161 = vmatpush1.msra.mxu0 0.0
    %162 = vmatprep.subr.mxu0 0.0
    %163 = vmatpush1.msra.mxu0 0.0
    %164 = vmatprep.subr.mxu0 0.0
    %165 = vmatpush1.msra.mxu0 0.0
    %166 = vmatprep.subr.mxu0 0.0
    %167 = vmatpush1.msra.mxu0 0.0
    %168 = vmatprep.subr.mxu0 0.0
    %169 = vmatpush1.msra.mxu0 0.0
    %170 = vmatprep.subr.mxu0 0.0
    %171 = vmatpush1.msra.mxu0 0.0
    %172 = vmatprep.mubr.f32.mxu0 0.0
    %173 = vmatmul.mubr.f32.gmra.mrb[0].mxu0 %v61
    %v174 = vpop.f32.mrb[0].mxu0
    %v175 = vadd.f32 %v57, %v174
    %v176 = vpop.f32.mrb[0].mxu0
    %177 = vmatprep.mubr.f32.mxu0 0.0
    %178 = vmatmul.mubr.f32.gmra.mrb[0].mxu0 %v64
    %v179 = vpop.f32.mrb[0].mxu0
    %v180 = vadd.f32 %v57, %v179
    %v181 = vpop.f32.mrb[0].mxu0
    %182 = vmatprep.mubr.f32.mxu0 0.0
    %183 = vmatmul.mubr.f32.gmra.mrb[0].mxu0 %v67
    %v184 = vpop.f32.mrb[0].mxu0
    %v185 = vadd.f32 %v57, %v184
    %v186 = vpop.f32.mrb[0].mxu0
    %187 = vmatprep.mubr.f32.mxu0 0.0
    %188 = vmatmul.mubr.f32.gmra.mrb[0].mxu0 %v70
    %v189 = vpop.f32.mrb[0].mxu0
    %v190 = vadd.f32 %v57, %v189
    %v191 = vpop.f32.mrb[0].mxu0
    %192 = vmatprep.mubr.f32.mxu0 0.0
    %193 = vmatmul.mubr.f32.gmra.mrb[0].mxu0 %v73
    %v194 = vpop.f32.mrb[0].mxu0
    %v195 = vadd.f32 %v57, %v194
    %v196 = vpop.f32.mrb[0].mxu0
    %197 = vmatprep.mubr.f32.mxu0 0.0
    %198 = vmatmul.mubr.f32.gmra.mrb[0].mxu0 %v76
    %v199 = vpop.f32.mrb[0].mxu0
    %v200 = vadd.f32 %v57, %v199
    %v201 = vpop.f32.mrb[0].mxu0
    %202 = vmatprep.mubr.f32.mxu0 0.0
    %203 = vmatmul.mubr.f32.gmra.mrb[0].mxu0 %v79
    %v204 = vpop.f32.mrb[0].mxu0
    %v205 = vadd.f32 %v57, %v204
    %v206 = vpop.f32.mrb[0].mxu0
    %207 = vmatprep.mubr.f32.mxu0 0.0
    %208 = vmatmul.mubr.f32.gmra.mrb[0].mxu0 %v82
    %v209 = vpop.f32.mrb[0].mxu0
    %v210 = vadd.f32 %v57, %v209
    %v211 = vpop.f32.mrb[0].mxu0
    %212 = vmatprep.mubr.f32.mxu0 0.0
    %213 = vmatmul.mubr.f32.gmra.mrb[0].mxu0 %v85
    %v214 = vpop.f32.mrb[0].mxu0
    %v215 = vadd.f32 %v57, %v214
    %v216 = vpop.f32.mrb[0].mxu0
    %217 = vmatprep.mubr.f32.mxu0 0.0
    %218 = vmatmul.mubr.f32.gmra.mrb[0].mxu0 %v88
    %v219 = vpop.f32.mrb[0].mxu0
    %v220 = vadd.f32 %v57, %v219
    %v221 = vpop.f32.mrb[0].mxu0
    %222 = vmatprep.mubr.f32.mxu0 0.0
    %223 = vmatmul.mubr.f32.gmra.mrb[0].mxu0 %v91
    %v224 = vpop.f32.mrb[0].mxu0
    %v225 = vadd.f32 %v57, %v224
    %v226 = vpop.f32.mrb[0].mxu0
    %227 = vmatprep.mubr.f32.mxu0 0.0
    %228 = vmatmul.mubr.f32.gmra.mrb[0].mxu0 %v94
    %v229 = vpop.f32.mrb[0].mxu0
    %v230 = vadd.f32 %v57, %v229
    %v231 = vpop.f32.mrb[0].mxu0
    %232 = vmatprep.mubr.f32.mxu0 0.0
    %233 = vmatmul.mubr.f32.gmra.mrb[0].mxu0 %v97
    %v234 = vpop.f32.mrb[0].mxu0
    %v235 = vadd.f32 %v57, %v234
    %v236 = vpop.f32.mrb[0].mxu0
    %237 = vmatprep.mubr.f32.mxu0 0.0
    %238 = vmatmul.mubr.f32.gmra.mrb[0].mxu0 %v100
    %v239 = vpop.f32.mrb[0].mxu0
    %v240 = vadd.f32 %v57, %v239
    %v241 = vpop.f32.mrb[0].mxu0
    %242 = vmatprep.mubr.f32.mxu0 0.0
    %243 = vmatmul.mubr.f32.gmra.mrb[0].mxu0 %v103
    %v244 = vpop.f32.mrb[0].mxu0
    %v245 = vadd.f32 %v57, %v244
    %v246 = vpop.f32.mrb[0].mxu0
    %247 = vmatprep.mubr.f32.mxu0 0.0
    %248 = vmatmul.mubr.f32.gmra.mrb[0].mxu0 %v106
    %v249 = vpop.f32.mrb[0].mxu0
    %v250 = vadd.f32 %v57, %v249
    %v251 = vpop.f32.mrb[0].mxu0
    %252 = vdwg.mxu0
    %v253 = vmul.f32 %v175, 0.5
    %v254 = vmul.f32 %v180, 0.5
    %v255 = vmul.f32 %v185, 0.5
    %v256 = vmul.f32 %v190, 0.5
    %v257 = vmul.f32 %v195, 0.5
    %v258 = vmul.f32 %v200, 0.5
    %v259 = vmul.f32 %v205, 0.5
    %v260 = vmul.f32 %v210, 0.5
    %v261 = vmul.f32 %v215, 0.5
    %v262 = vmul.f32 %v220, 0.5
    %v263 = vmul.f32 %v225, 0.5
    %v264 = vmul.f32 %v230, 0.5
    %v265 = vmul.f32 %v235, 0.5
    %v266 = vmul.f32 %v240, 0.5
    %v267 = vmul.f32 %v245, 0.5
    %v268 = vmul.f32 %v250, 0.5
    %v269 = vtanh.pop %v253
    %v270 = vtanh.pop %v254
    %v271 = vtanh.pop %v255
    %v272 = vtanh.pop %v256
    %v273 = vtanh.pop %v257
    %v274 = vtanh.pop %v258
    %v275 = vtanh.pop %v259
    %v276 = vtanh.pop %v260
    %v277 = vtanh.pop %v261
    %v278 = vtanh.pop %v262
    %v279 = vtanh.pop %v263
    %v280 = vtanh.pop %v264
    %v281 = vtanh.pop %v265
    %v282 = vtanh.pop %v266
    %v283 = vtanh.pop %v267
    %v284 = vtanh.pop %v268
    %v285 = vmul.f32 %v269, 0.5
    %v286 = vmul.f32 %v270, 0.5
    %v287 = vmul.f32 %v271, 0.5
    %v288 = vmul.f32 %v272, 0.5
    %v289 = vmul.f32 %v273, 0.5
    %v290 = vmul.f32 %v274, 0.5
    %v291 = vmul.f32 %v275, 0.5
    %v292 = vmul.f32 %v276, 0.5
    %v293 = vmul.f32 %v277, 0.5
    %v294 = vmul.f32 %v278, 0.5
    %v295 = vmul.f32 %v279, 0.5
    %v296 = vmul.f32 %v280, 0.5
    %v297 = vmul.f32 %v281, 0.5
    %v298 = vmul.f32 %v282, 0.5
    %v299 = vmul.f32 %v283, 0.5
    %v300 = vmul.f32 %v284, 0.5
    %v301 = vadd.f32 %v285, 0.5
    %v302 = vadd.f32 %v286, 0.5
    %v303 = vadd.f32 %v287, 0.5
    %v304 = vadd.f32 %v288, 0.5
    %v305 = vadd.f32 %v289, 0.5
    %v306 = vadd.f32 %v290, 0.5
    %v307 = vadd.f32 %v291, 0.5
    %v308 = vadd.f32 %v292, 0.5
    %v309 = vadd.f32 %v293, 0.5
    %v310 = vadd.f32 %v294, 0.5
    %v311 = vadd.f32 %v295, 0.5
    %v312 = vadd.f32 %v296, 0.5
    %v313 = vadd.f32 %v297, 0.5
    %v314 = vadd.f32 %v298, 0.5
    %v315 = vadd.f32 %v299, 0.5
    %v316 = vadd.f32 %v300, 0.5
    %v317 = vld [vmem:[%s3] sm:$0xff]
    %v318 = vld [vmem:[%s3 + $0x8] sm:$0xff]
    %v319 = vld [vmem:[%s3 + $0x10] sm:$0xff]
    %v320 = vld [vmem:[%s3 + $0x18] sm:$0xff]
    %v321 = vld [vmem:[%s3 + $0x20] sm:$0xff]
    %v322 = vld [vmem:[%s3 + $0x28] sm:$0xff]
    %v323 = vld [vmem:[%s3 + $0x30] sm:$0xff]
    %v324 = vld [vmem:[%s3 + $0x38] sm:$0xff]
    %v325 = vld [vmem:[%s3 + $0x40] sm:$0xff]
    %v326 = vld [vmem:[%s3 + $0x48] sm:$0xff]
    %v327 = vld [vmem:[%s3 + $0x50] sm:$0xff]
    %v328 = vld [vmem:[%s3 + $0x58] sm:$0xff]
    %v329 = vld [vmem:[%s3 + $0x60] sm:$0xff]
    %v330 = vld [vmem:[%s3 + $0x68] sm:$0xff]
    %v331 = vld [vmem:[%s3 + $0x70] sm:$0xff]
    %v332 = vld [vmem:[%s3 + $0x78] sm:$0xff]
    %v333 = vld [vmem:[%s4] sm:$0xff]
    %v334 = vld [vmem:[%s4 + $0x8] sm:$0xff]
    %v335 = vld [vmem:[%s4 + $0x10] sm:$0xff]
    %v336 = vld [vmem:[%s4 + $0x18] sm:$0xff]
    %v337 = vld [vmem:[%s4 + $0x20] sm:$0xff]
    %v338 = vld [vmem:[%s4 + $0x28] sm:$0xff]
    %v339 = vld [vmem:[%s4 + $0x30] sm:$0xff]
    %v340 = vld [vmem:[%s4 + $0x38] sm:$0xff]
    %v341 = vld [vmem:[%s4 + $0x40] sm:$0xff]
    %v342 = vld [vmem:[%s4 + $0x48] sm:$0xff]
    %v343 = vld [vmem:[%s4 + $0x50] sm:$0xff]
    %v344 = vld [vmem:[%s4 + $0x58] sm:$0xff]
    %v345 = vld [vmem:[%s4 + $0x60] sm:$0xff]
    %v346 = vld [vmem:[%s4 + $0x68] sm:$0xff]
    %v347 = vld [vmem:[%s4 + $0x70] sm:$0xff]
    %v348 = vld [vmem:[%s4 + $0x78] sm:$0xff]
    %350 = vset.pattern.permute.xlu0 0
    %351 = vperm.xlu0 %350, %v333
    %v352 = vpop.permute.xlu0 %351
    %355 = vset.pattern.permute.xlu0 0
    %356 = vperm.xlu0 %355, %v334
    %v357 = vpop.permute.xlu0 %356
    %360 = vset.pattern.permute.xlu0 0
    %361 = vperm.xlu0 %360, %v335
    %v362 = vpop.permute.xlu0 %361
    %365 = vset.pattern.permute.xlu0 0
    %366 = vperm.xlu0 %365, %v336
    %v367 = vpop.permute.xlu0 %366
    %370 = vset.pattern.permute.xlu0 0
    %371 = vperm.xlu0 %370, %v337
    %v372 = vpop.permute.xlu0 %371
    %375 = vset.pattern.permute.xlu0 0
    %376 = vperm.xlu0 %375, %v338
    %v377 = vpop.permute.xlu0 %376
    %380 = vset.pattern.permute.xlu0 0
    %381 = vperm.xlu0 %380, %v339
    %v382 = vpop.permute.xlu0 %381
    %385 = vset.pattern.permute.xlu0 0
    %386 = vperm.xlu0 %385, %v340
    %v387 = vpop.permute.xlu0 %386
    %390 = vset.pattern.permute.xlu0 0
    %391 = vperm.xlu0 %390, %v341
    %v392 = vpop.permute.xlu0 %391
    %395 = vset.pattern.permute.xlu0 0
    %396 = vperm.xlu0 %395, %v342
    %v397 = vpop.permute.xlu0 %396
    %400 = vset.pattern.permute.xlu0 0
    %401 = vperm.xlu0 %400, %v343
    %v402 = vpop.permute.xlu0 %401
    %405 = vset.pattern.permute.xlu0 0
    %406 = vperm.xlu0 %405, %v344
    %v407 = vpop.permute.xlu0 %406
    %410 = vset.pattern.permute.xlu0 0
    %411 = vperm.xlu0 %410, %v345
    %v412 = vpop.permute.xlu0 %411
    %415 = vset.pattern.permute.xlu0 0
    %416 = vperm.xlu0 %415, %v346
    %v417 = vpop.permute.xlu0 %416
    %420 = vset.pattern.permute.xlu0 0
    %421 = vperm.xlu0 %420, %v347
    %v422 = vpop.permute.xlu0 %421
    %425 = vset.pattern.permute.xlu0 0
    %426 = vperm.xlu0 %425, %v348
    %v427 = vpop.permute.xlu0 %426
    %429 = vmatprep.subr.mxu0 0.0
    %430 = vmatpush1.xpose.msra.mxu0 %v301
    %431 = vmatprep.subr.mxu0 0.0
    %432 = vmatpush1.xpose.msra.mxu0 %v302
    %433 = vmatprep.subr.mxu0 0.0
    %434 = vmatpush1.xpose.msra.mxu0 %v303
    %435 = vmatprep.subr.mxu0 0.0
    %436 = vmatpush1.xpose.msra.mxu0 %v304
    %437 = vmatprep.subr.mxu0 0.0
    %438 = vmatpush1.xpose.msra.mxu0 %v305
    %439 = vmatprep.subr.mxu0 0.0
    %440 = vmatpush1.xpose.msra.mxu0 %v306
    %441 = vmatprep.subr.mxu0 0.0
    %442 = vmatpush1.xpose.msra.mxu0 %v307
    %443 = vmatprep.subr.mxu0 0.0
    %444 = vmatpush1.xpose.msra.mxu0 %v308
    %445 = vmatprep.subr.mxu0 0.0
    %446 = vmatpush1.xpose.msra.mxu0 %v309
    %447 = vmatprep.subr.mxu0 0.0
    %448 = vmatpush1.xpose.msra.mxu0 %v310
    %449 = vmatprep.subr.mxu0 0.0
    %450 = vmatpush1.xpose.msra.mxu0 %v311
    %451 = vmatprep.subr.mxu0 0.0
    %452 = vmatpush1.xpose.msra.mxu0 %v312
    %453 = vmatprep.subr.mxu0 0.0
    %454 = vmatpush1.xpose.msra.mxu0 %v313
    %455 = vmatprep.subr.mxu0 0.0
    %456 = vmatpush1.xpose.msra.mxu0 %v314
    %457 = vmatprep.subr.mxu0 0.0
    %458 = vmatpush1.xpose.msra.mxu0 %v315
    %459 = vmatprep.subr.mxu0 0.0
    %460 = vmatpush1.xpose.msra.mxu0 %v316
    %461 = vmatprep.subr.mxu0 0.0
    %462 = vmatpush1.xpose.msra.mxu0 0.0
    %463 = vmatprep.subr.mxu0 0.0
    %464 = vmatpush1.xpose.msra.mxu0 0.0
    %465 = vmatprep.subr.mxu0 0.0
    %466 = vmatpush1.xpose.msra.mxu0 0.0
    %467 = vmatprep.subr.mxu0 0.0
    %468 = vmatpush1.xpose.msra.mxu0 0.0
    %469 = vmatprep.subr.mxu0 0.0
    %470 = vmatpush1.xpose.msra.mxu0 0.0
    %471 = vmatprep.subr.mxu0 0.0
    %472 = vmatpush1.xpose.msra.mxu0 0.0
    %473 = vmatprep.subr.mxu0 0.0
    %474 = vmatpush1.xpose.msra.mxu0 0.0
    %475 = vmatprep.subr.mxu0 0.0
    %476 = vmatpush1.xpose.msra.mxu0 0.0
    %477 = vmatprep.subr.mxu0 0.0
    %478 = vmatpush1.xpose.msra.mxu0 0.0
    %479 = vmatprep.subr.mxu0 0.0
    %480 = vmatpush1.xpose.msra.mxu0 0.0
    %481 = vmatprep.subr.mxu0 0.0
    %482 = vmatpush1.xpose.msra.mxu0 0.0
    %483 = vmatprep.subr.mxu0 0.0
    %484 = vmatpush1.xpose.msra.mxu0 0.0
    %485 = vmatprep.subr.mxu0 0.0
    %486 = vmatpush1.xpose.msra.mxu0 0.0
    %487 = vmatprep.subr.mxu0 0.0
    %488 = vmatpush1.xpose.msra.mxu0 0.0
    %489 = vmatprep.subr.mxu0 0.0
    %490 = vmatpush1.xpose.msra.mxu0 0.0
    %491 = vmatprep.subr.mxu0 0.0
    %492 = vmatpush1.xpose.msra.mxu0 0.0
    %493 = vmatprep.mubr.f32.mxu0 0.0
    %494 = vmatmul.mubr.f32.gmra.mrb[0].mxu0 %v317
    %v495 = vpop.f32.mrb[0].mxu0
    %v496 = vadd.f32 %v352, %v495
    %v497 = vpop.f32.mrb[0].mxu0
    %498 = vmatprep.mubr.f32.mxu0 0.0
    %499 = vmatmul.mubr.f32.gmra.mrb[0].mxu0 %v318
    %v500 = vpop.f32.mrb[0].mxu0
    %v501 = vadd.f32 %v357, %v500
    %v502 = vpop.f32.mrb[0].mxu0
    %503 = vmatprep.mubr.f32.mxu0 0.0
    %504 = vmatmul.mubr.f32.gmra.mrb[0].mxu0 %v319
    %v505 = vpop.f32.mrb[0].mxu0
    %v506 = vadd.f32 %v362, %v505
    %v507 = vpop.f32.mrb[0].mxu0
    %508 = vmatprep.mubr.f32.mxu0 0.0
    %509 = vmatmul.mubr.f32.gmra.mrb[0].mxu0 %v320
    %v510 = vpop.f32.mrb[0].mxu0
    %v511 = vadd.f32 %v367, %v510
    %v512 = vpop.f32.mrb[0].mxu0
    %513 = vmatprep.mubr.f32.mxu0 0.0
    %514 = vmatmul.mubr.f32.gmra.mrb[0].mxu0 %v321
    %v515 = vpop.f32.mrb[0].mxu0
    %v516 = vadd.f32 %v372, %v515
    %v517 = vpop.f32.mrb[0].mxu0
    %518 = vmatprep.mubr.f32.mxu0 0.0
    %519 = vmatmul.mubr.f32.gmra.mrb[0].mxu0 %v322
    %v520 = vpop.f32.mrb[0].mxu0
    %v521 = vadd.f32 %v377, %v520
    %v522 = vpop.f32.mrb[0].mxu0
    %523 = vmatprep.mubr.f32.mxu0 0.0
    %524 = vmatmul.mubr.f32.gmra.mrb[0].mxu0 %v323
    %v525 = vpop.f32.mrb[0].mxu0
    %v526 = vadd.f32 %v382, %v525
    %v527 = vpop.f32.mrb[0].mxu0
    %528 = vmatprep.mubr.f32.mxu0 0.0
    %529 = vmatmul.mubr.f32.gmra.mrb[0].mxu0 %v324
    %v530 = vpop.f32.mrb[0].mxu0
    %v531 = vadd.f32 %v387, %v530
    %v532 = vpop.f32.mrb[0].mxu0
    %533 = vmatprep.mubr.f32.mxu0 0.0
    %534 = vmatmul.mubr.f32.gmra.mrb[0].mxu0 %v325
    %v535 = vpop.f32.mrb[0].mxu0
    %v536 = vadd.f32 %v392, %v535
    %v537 = vpop.f32.mrb[0].mxu0
    %538 = vmatprep.mubr.f32.mxu0 0.0
    %539 = vmatmul.mubr.f32.gmra.mrb[0].mxu0 %v326
    %v540 = vpop.f32.mrb[0].mxu0
    %v541 = vadd.f32 %v397, %v540
    %v542 = vpop.f32.mrb[0].mxu0
    %543 = vmatprep.mubr.f32.mxu0 0.0
    %544 = vmatmul.mubr.f32.gmra.mrb[0].mxu0 %v327
    %v545 = vpop.f32.mrb[0].mxu0
    %v546 = vadd.f32 %v402, %v545
    %v547 = vpop.f32.mrb[0].mxu0
    %548 = vmatprep.mubr.f32.mxu0 0.0
    %549 = vmatmul.mubr.f32.gmra.mrb[0].mxu0 %v328
    %v550 = vpop.f32.mrb[0].mxu0
    %v551 = vadd.f32 %v407, %v550
    %v552 = vpop.f32.mrb[0].mxu0
    %553 = vmatprep.mubr.f32.mxu0 0.0
    %554 = vmatmul.mubr.f32.gmra.mrb[0].mxu0 %v329
    %v555 = vpop.f32.mrb[0].mxu0
    %v556 = vadd.f32 %v412, %v555
    %v557 = vpop.f32.mrb[0].mxu0
    %558 = vmatprep.mubr.f32.mxu0 0.0
    %559 = vmatmul.mubr.f32.gmra.mrb[0].mxu0 %v330
    %v560 = vpop.f32.mrb[0].mxu0
    %v561 = vadd.f32 %v417, %v560
    %v562 = vpop.f32.mrb[0].mxu0
    %563 = vmatprep.mubr.f32.mxu0 0.0
    %564 = vmatmul.mubr.f32.gmra.mrb[0].mxu0 %v331
    %v565 = vpop.f32.mrb[0].mxu0
    %v566 = vadd.f32 %v422, %v565
    %v567 = vpop.f32.mrb[0].mxu0
    %568 = vmatprep.mubr.f32.mxu0 0.0
    %569 = vmatmul.mubr.f32.gmra.mrb[0].mxu0 %v332
    %v570 = vpop.f32.mrb[0].mxu0
    %v571 = vadd.f32 %v427, %v570
    %v572 = vpop.f32.mrb[0].mxu0
    %573 = vdwg.mxu0
    %v574 = vmul.f32 %v496, 0.5
    %v575 = vmul.f32 %v501, 0.5
    %v576 = vmul.f32 %v506, 0.5
    %v577 = vmul.f32 %v511, 0.5
    %v578 = vmul.f32 %v516, 0.5
    %v579 = vmul.f32 %v521, 0.5
    %v580 = vmul.f32 %v526, 0.5
    %v581 = vmul.f32 %v531, 0.5
    %v582 = vmul.f32 %v536, 0.5
    %v583 = vmul.f32 %v541, 0.5
    %v584 = vmul.f32 %v546, 0.5
    %v585 = vmul.f32 %v551, 0.5
    %v586 = vmul.f32 %v556, 0.5
    %v587 = vmul.f32 %v561, 0.5
    %v588 = vmul.f32 %v566, 0.5
    %v589 = vmul.f32 %v571, 0.5
    %v590 = vtanh.pop %v574
    %v591 = vtanh.pop %v575
    %v592 = vtanh.pop %v576
    %v593 = vtanh.pop %v577
    %v594 = vtanh.pop %v578
    %v595 = vtanh.pop %v579
    %v596 = vtanh.pop %v580
    %v597 = vtanh.pop %v581
    %v598 = vtanh.pop %v582
    %v599 = vtanh.pop %v583
    %v600 = vtanh.pop %v584
    %v601 = vtanh.pop %v585
    %v602 = vtanh.pop %v586
    %v603 = vtanh.pop %v587
    %v604 = vtanh.pop %v588
    %v605 = vtanh.pop %v589
    %v606 = vmul.f32 %v590, 0.5
    %v607 = vmul.f32 %v591, 0.5
    %v608 = vmul.f32 %v592, 0.5
    %v609 = vmul.f32 %v593, 0.5
    %v610 = vmul.f32 %v594, 0.5
    %v611 = vmul.f32 %v595, 0.5
    %v612 = vmul.f32 %v596, 0.5
    %v613 = vmul.f32 %v597, 0.5
    %v614 = vmul.f32 %v598, 0.5
    %v615 = vmul.f32 %v599, 0.5
    %v616 = vmul.f32 %v600, 0.5
    %v617 = vmul.f32 %v601, 0.5
    %v618 = vmul.f32 %v602, 0.5
    %v619 = vmul.f32 %v603, 0.5
    %v620 = vmul.f32 %v604, 0.5
    %v621 = vmul.f32 %v605, 0.5
    %v622 = vadd.f32 %v606, 0.5
    %v623 = vadd.f32 %v607, 0.5
    %v624 = vadd.f32 %v608, 0.5
    %v625 = vadd.f32 %v609, 0.5
    %v626 = vadd.f32 %v610, 0.5
    %v627 = vadd.f32 %v611, 0.5
    %v628 = vadd.f32 %v612, 0.5
    %v629 = vadd.f32 %v613, 0.5
    %v630 = vadd.f32 %v614, 0.5
    %v631 = vadd.f32 %v615, 0.5
    %v632 = vadd.f32 %v616, 0.5
    %v633 = vadd.f32 %v617, 0.5
    %v634 = vadd.f32 %v618, 0.5
    %v635 = vadd.f32 %v619, 0.5
    %v636 = vadd.f32 %v620, 0.5
    %v637 = vadd.f32 %v621, 0.5
    %v638 = vld [vmem:[%s5] sm:$0xff]
    %v639 = vld [vmem:[%s5 + $0x8] sm:$0xff]
    %v640 = vld [vmem:[%s5 + $0x10] sm:$0xff]
    %v641 = vld [vmem:[%s5 + $0x18] sm:$0xff]
    %v642 = vld [vmem:[%s5 + $0x20] sm:$0xff]
    %v643 = vld [vmem:[%s5 + $0x28] sm:$0xff]
    %v644 = vld [vmem:[%s5 + $0x30] sm:$0xff]
    %v645 = vld [vmem:[%s5 + $0x38] sm:$0xff]
    %v646 = vld [vmem:[%s5 + $0x40] sm:$0xff]
    %v647 = vld [vmem:[%s5 + $0x48] sm:$0xff]
    %v648 = vld [vmem:[%s5 + $0x50] sm:$0xff]
    %v649 = vld [vmem:[%s5 + $0x58] sm:$0xff]
    %v650 = vld [vmem:[%s5 + $0x60] sm:$0xff]
    %v651 = vld [vmem:[%s5 + $0x68] sm:$0xff]
    %v652 = vld [vmem:[%s5 + $0x70] sm:$0xff]
    %v653 = vld [vmem:[%s5 + $0x78] sm:$0xff]
    %v654 = vld [vmem:[%s6] sm:$0xff]
    %v655 = vld [vmem:[%s6 + $0x8] sm:$0xff]
    %v656 = vld [vmem:[%s6 + $0x10] sm:$0xff]
    %v657 = vld [vmem:[%s6 + $0x18] sm:$0xff]
    %v658 = vld [vmem:[%s6 + $0x20] sm:$0xff]
    %v659 = vld [vmem:[%s6 + $0x28] sm:$0xff]
    %v660 = vld [vmem:[%s6 + $0x30] sm:$0xff]
    %v661 = vld [vmem:[%s6 + $0x38] sm:$0xff]
    %v662 = vld [vmem:[%s6 + $0x40] sm:$0xff]
    %v663 = vld [vmem:[%s6 + $0x48] sm:$0xff]
    %v664 = vld [vmem:[%s6 + $0x50] sm:$0xff]
    %v665 = vld [vmem:[%s6 + $0x58] sm:$0xff]
    %v666 = vld [vmem:[%s6 + $0x60] sm:$0xff]
    %v667 = vld [vmem:[%s6 + $0x68] sm:$0xff]
    %v668 = vld [vmem:[%s6 + $0x70] sm:$0xff]
    %v669 = vld [vmem:[%s6 + $0x78] sm:$0xff]
    %671 = vset.pattern.permute.xlu0 0
    %672 = vperm.xlu0 %671, %v654
    %v673 = vpop.permute.xlu0 %672
    %676 = vset.pattern.permute.xlu0 0
    %677 = vperm.xlu0 %676, %v655
    %v678 = vpop.permute.xlu0 %677
    %681 = vset.pattern.permute.xlu0 0
    %682 = vperm.xlu0 %681, %v656
    %v683 = vpop.permute.xlu0 %682
    %686 = vset.pattern.permute.xlu0 0
    %687 = vperm.xlu0 %686, %v657
    %v688 = vpop.permute.xlu0 %687
    %691 = vset.pattern.permute.xlu0 0
    %692 = vperm.xlu0 %691, %v658
    %v693 = vpop.permute.xlu0 %692
    %696 = vset.pattern.permute.xlu0 0
    %697 = vperm.xlu0 %696, %v659
    %v698 = vpop.permute.xlu0 %697
    %701 = vset.pattern.permute.xlu0 0
    %702 = vperm.xlu0 %701, %v660
    %v703 = vpop.permute.xlu0 %702
    %706 = vset.pattern.permute.xlu0 0
    %707 = vperm.xlu0 %706, %v661
    %v708 = vpop.permute.xlu0 %707
    %711 = vset.pattern.permute.xlu0 0
    %712 = vperm.xlu0 %711, %v662
    %v713 = vpop.permute.xlu0 %712
    %716 = vset.pattern.permute.xlu0 0
    %717 = vperm.xlu0 %716, %v663
    %v718 = vpop.permute.xlu0 %717
    %721 = vset.pattern.permute.xlu0 0
    %722 = vperm.xlu0 %721, %v664
    %v723 = vpop.permute.xlu0 %722
    %726 = vset.pattern.permute.xlu0 0
    %727 = vperm.xlu0 %726, %v665
    %v728 = vpop.permute.xlu0 %727
    %731 = vset.pattern.permute.xlu0 0
    %732 = vperm.xlu0 %731, %v666
    %v733 = vpop.permute.xlu0 %732
    %736 = vset.pattern.permute.xlu0 0
    %737 = vperm.xlu0 %736, %v667
    %v738 = vpop.permute.xlu0 %737
    %741 = vset.pattern.permute.xlu0 0
    %742 = vperm.xlu0 %741, %v668
    %v743 = vpop.permute.xlu0 %742
    %746 = vset.pattern.permute.xlu0 0
    %747 = vperm.xlu0 %746, %v669
    %v748 = vpop.permute.xlu0 %747
    %750 = vmatprep.subr.mxu0 0.0
    %751 = vmatpush1.msra.mxu0 %v622
    %752 = vmatprep.subr.mxu0 0.0
    %753 = vmatpush1.msra.mxu0 %v623
    %754 = vmatprep.subr.mxu0 0.0
    %755 = vmatpush1.msra.mxu0 %v624
    %756 = vmatprep.subr.mxu0 0.0
    %757 = vmatpush1.msra.mxu0 %v625
    %758 = vmatprep.subr.mxu0 0.0
    %759 = vmatpush1.msra.mxu0 %v626
    %760 = vmatprep.subr.mxu0 0.0
    %761 = vmatpush1.msra.mxu0 %v627
    %762 = vmatprep.subr.mxu0 0.0
    %763 = vmatpush1.msra.mxu0 %v628
    %764 = vmatprep.subr.mxu0 0.0
    %765 = vmatpush1.msra.mxu0 %v629
    %766 = vmatprep.subr.mxu0 0.0
    %767 = vmatpush1.msra.mxu0 %v630
    %768 = vmatprep.subr.mxu0 0.0
    %769 = vmatpush1.msra.mxu0 %v631
    %770 = vmatprep.subr.mxu0 0.0
    %771 = vmatpush1.msra.mxu0 %v632
    %772 = vmatprep.subr.mxu0 0.0
    %773 = vmatpush1.msra.mxu0 %v633
    %774 = vmatprep.subr.mxu0 0.0
    %775 = vmatpush1.msra.mxu0 %v634
    %776 = vmatprep.subr.mxu0 0.0
    %777 = vmatpush1.msra.mxu0 %v635
    %778 = vmatprep.subr.mxu0 0.0
    %779 = vmatpush1.msra.mxu0 %v636
    %780 = vmatprep.subr.mxu0 0.0
    %781 = vmatpush1.msra.mxu0 %v637
    %782 = vmatprep.subr.mxu0 0.0
    %783 = vmatpush1.msra.mxu0 0.0
    %784 = vmatprep.subr.mxu0 0.0
    %785 = vmatpush1.msra.mxu0 0.0
    %786 = vmatprep.subr.mxu0 0.0
    %787 = vmatpush1.msra.mxu0 0.0
    %788 = vmatprep.subr.mxu0 0.0
    %789 = vmatpush1.msra.mxu0 0.0
    %790 = vmatprep.subr.mxu0 0.0
    %791 = vmatpush1.msra.mxu0 0.0
    %792 = vmatprep.subr.mxu0 0.0
    %793 = vmatpush1.msra.mxu0 0.0
    %794 = vmatprep.subr.mxu0 0.0
    %795 = vmatpush1.msra.mxu0 0.0
    %796 = vmatprep.subr.mxu0 0.0
    %797 = vmatpush1.msra.mxu0 0.0
    %798 = vmatprep.subr.mxu0 0.0
    %799 = vmatpush1.msra.mxu0 0.0
    %800 = vmatprep.subr.mxu0 0.0
    %801 = vmatpush1.msra.mxu0 0.0
    %802 = vmatprep.subr.mxu0 0.0
    %803 = vmatpush1.msra.mxu0 0.0
    %804 = vmatprep.subr.mxu0 0.0
    %805 = vmatpush1.msra.mxu0 0.0
    %806 = vmatprep.subr.mxu0 0.0
    %807 = vmatpush1.msra.mxu0 0.0
    %808 = vmatprep.subr.mxu0 0.0
    %809 = vmatpush1.msra.mxu0 0.0
    %810 = vmatprep.subr.mxu0 0.0
    %811 = vmatpush1.msra.mxu0 0.0
    %812 = vmatprep.subr.mxu0 0.0
    %813 = vmatpush1.msra.mxu0 0.0
    %814 = vmatprep.mubr.f32.mxu0 0.0
    %815 = vmatmul.mubr.f32.gmra.mrb[0].mxu0 %v638
    %v816 = vpop.f32.mrb[0].mxu0
    %v817 = vadd.f32 %v673, %v816
    %v818 = vpop.f32.mrb[0].mxu0
    %819 = vmatprep.mubr.f32.mxu0 0.0
    %820 = vmatmul.mubr.f32.gmra.mrb[0].mxu0 %v639
    %v821 = vpop.f32.mrb[0].mxu0
    %v822 = vadd.f32 %v678, %v821
    %v823 = vpop.f32.mrb[0].mxu0
    %824 = vmatprep.mubr.f32.mxu0 0.0
    %825 = vmatmul.mubr.f32.gmra.mrb[0].mxu0 %v640
    %v826 = vpop.f32.mrb[0].mxu0
    %v827 = vadd.f32 %v683, %v826
    %v828 = vpop.f32.mrb[0].mxu0
    %829 = vmatprep.mubr.f32.mxu0 0.0
    %830 = vmatmul.mubr.f32.gmra.mrb[0].mxu0 %v641
    %v831 = vpop.f32.mrb[0].mxu0
    %v832 = vadd.f32 %v688, %v831
    %v833 = vpop.f32.mrb[0].mxu0
    %834 = vmatprep.mubr.f32.mxu0 0.0
    %835 = vmatmul.mubr.f32.gmra.mrb[0].mxu0 %v642
    %v836 = vpop.f32.mrb[0].mxu0
    %v837 = vadd.f32 %v693, %v836
    %v838 = vpop.f32.mrb[0].mxu0
    %839 = vmatprep.mubr.f32.mxu0 0.0
    %840 = vmatmul.mubr.f32.gmra.mrb[0].mxu0 %v643
    %v841 = vpop.f32.mrb[0].mxu0
    %v842 = vadd.f32 %v698, %v841
    %v843 = vpop.f32.mrb[0].mxu0
    %844 = vmatprep.mubr.f32.mxu0 0.0
    %845 = vmatmul.mubr.f32.gmra.mrb[0].mxu0 %v644
    %v846 = vpop.f32.mrb[0].mxu0
    %v847 = vadd.f32 %v703, %v846
    %v848 = vpop.f32.mrb[0].mxu0
    %849 = vmatprep.mubr.f32.mxu0 0.0
    %850 = vmatmul.mubr.f32.gmra.mrb[0].mxu0 %v645
    %v851 = vpop.f32.mrb[0].mxu0
    %v852 = vadd.f32 %v708, %v851
    %v853 = vpop.f32.mrb[0].mxu0
    %854 = vmatprep.mubr.f32.mxu0 0.0
    %855 = vmatmul.mubr.f32.gmra.mrb[0].mxu0 %v646
    %v856 = vpop.f32.mrb[0].mxu0
    %v857 = vadd.f32 %v713, %v856
    %v858 = vpop.f32.mrb[0].mxu0
    %859 = vmatprep.mubr.f32.mxu0 0.0
    %860 = vmatmul.mubr.f32.gmra.mrb[0].mxu0 %v647
    %v861 = vpop.f32.mrb[0].mxu0
    %v862 = vadd.f32 %v718, %v861
    %v863 = vpop.f32.mrb[0].mxu0
    %864 = vmatprep.mubr.f32.mxu0 0.0
    %865 = vmatmul.mubr.f32.gmra.mrb[0].mxu0 %v648
    %v866 = vpop.f32.mrb[0].mxu0
    %v867 = vadd.f32 %v723, %v866
    %v868 = vpop.f32.mrb[0].mxu0
    %869 = vmatprep.mubr.f32.mxu0 0.0
    %870 = vmatmul.mubr.f32.gmra.mrb[0].mxu0 %v649
    %v871 = vpop.f32.mrb[0].mxu0
    %v872 = vadd.f32 %v728, %v871
    %v873 = vpop.f32.mrb[0].mxu0
    %874 = vmatprep.mubr.f32.mxu0 0.0
    %875 = vmatmul.mubr.f32.gmra.mrb[0].mxu0 %v650
    %v876 = vpop.f32.mrb[0].mxu0
    %v877 = vadd.f32 %v733, %v876
    %v878 = vpop.f32.mrb[0].mxu0
    %879 = vmatprep.mubr.f32.mxu0 0.0
    %880 = vmatmul.mubr.f32.gmra.mrb[0].mxu0 %v651
    %v881 = vpop.f32.mrb[0].mxu0
    %v882 = vadd.f32 %v738, %v881
    %v883 = vpop.f32.mrb[0].mxu0
    %884 = vmatprep.mubr.f32.mxu0 0.0
    %885 = vmatmul.mubr.f32.gmra.mrb[0].mxu0 %v652
    %v886 = vpop.f32.mrb[0].mxu0
    %v887 = vadd.f32 %v743, %v886
    %v888 = vpop.f32.mrb[0].mxu0
    %889 = vmatprep.mubr.f32.mxu0 0.0
    %890 = vmatmul.mubr.f32.gmra.mrb[0].mxu0 %v653
    %v891 = vpop.f32.mrb[0].mxu0
    %v892 = vadd.f32 %v748, %v891
    %v893 = vpop.f32.mrb[0].mxu0
    %894 = vdwg.mxu0
    %v895 = vmul.f32 %v817, 0.5
    %v896 = vmul.f32 %v822, 0.5
    %v897 = vmul.f32 %v827, 0.5
    %v898 = vmul.f32 %v832, 0.5
    %v899 = vmul.f32 %v837, 0.5
    %v900 = vmul.f32 %v842, 0.5
    %v901 = vmul.f32 %v847, 0.5
    %v902 = vmul.f32 %v852, 0.5
    %v903 = vmul.f32 %v857, 0.5
    %v904 = vmul.f32 %v862, 0.5
    %v905 = vmul.f32 %v867, 0.5
    %v906 = vmul.f32 %v872, 0.5
    %v907 = vmul.f32 %v877, 0.5
    %v908 = vmul.f32 %v882, 0.5
    %v909 = vmul.f32 %v887, 0.5
    %v910 = vmul.f32 %v892, 0.5
    %v911 = vtanh.pop %v895
    %v912 = vtanh.pop %v896
    %v913 = vtanh.pop %v897
    %v914 = vtanh.pop %v898
    %v915 = vtanh.pop %v899
    %v916 = vtanh.pop %v900
    %v917 = vtanh.pop %v901
    %v918 = vtanh.pop %v902
    %v919 = vtanh.pop %v903
    %v920 = vtanh.pop %v904
    %v921 = vtanh.pop %v905
    %v922 = vtanh.pop %v906
    %v923 = vtanh.pop %v907
    %v924 = vtanh.pop %v908
    %v925 = vtanh.pop %v909
    %v926 = vtanh.pop %v910
    %v927 = vmul.f32 %v911, 0.5
    %v928 = vmul.f32 %v912, 0.5
    %v929 = vmul.f32 %v913, 0.5
    %v930 = vmul.f32 %v914, 0.5
    %v931 = vmul.f32 %v915, 0.5
    %v932 = vmul.f32 %v916, 0.5
    %v933 = vmul.f32 %v917, 0.5
    %v934 = vmul.f32 %v918, 0.5
    %v935 = vmul.f32 %v919, 0.5
    %v936 = vmul.f32 %v920, 0.5
    %v937 = vmul.f32 %v921, 0.5
    %v938 = vmul.f32 %v922, 0.5
    %v939 = vmul.f32 %v923, 0.5
    %v940 = vmul.f32 %v924, 0.5
    %v941 = vmul.f32 %v925, 0.5
    %v942 = vmul.f32 %v926, 0.5
    %v943 = vadd.f32 %v927, 0.5
    %v944 = vadd.f32 %v928, 0.5
    %v945 = vadd.f32 %v929, 0.5
    %v946 = vadd.f32 %v930, 0.5
    %v947 = vadd.f32 %v931, 0.5
    %v948 = vadd.f32 %v932, 0.5
    %v949 = vadd.f32 %v933, 0.5
    %v950 = vadd.f32 %v934, 0.5
    %v951 = vadd.f32 %v935, 0.5
    %v952 = vadd.f32 %v936, 0.5
    %v953 = vadd.f32 %v937, 0.5
    %v954 = vadd.f32 %v938, 0.5
    %v955 = vadd.f32 %v939, 0.5
    %v956 = vadd.f32 %v940, 0.5
    %v957 = vadd.f32 %v941, 0.5
    %v958 = vadd.f32 %v942, 0.5
    %v959 = vld [vmem:[%s7] sm:$0xff]
    %v960 = vld [vmem:[%s7 + $0x8] sm:$0xff]
    %v961 = vld [vmem:[%s7 + $0x10] sm:$0xff]
    %v962 = vld [vmem:[%s7 + $0x18] sm:$0xff]
    %v963 = vld [vmem:[%s7 + $0x20] sm:$0xff]
    %v964 = vld [vmem:[%s7 + $0x28] sm:$0xff]
    %v965 = vld [vmem:[%s7 + $0x30] sm:$0xff]
    %v966 = vld [vmem:[%s7 + $0x38] sm:$0xff]
    %v967 = vld [vmem:[%s7 + $0x40] sm:$0xff]
    %v968 = vld [vmem:[%s7 + $0x48] sm:$0xff]
    %v969 = vld [vmem:[%s7 + $0x50] sm:$0xff]
    %v970 = vld [vmem:[%s7 + $0x58] sm:$0xff]
    %v971 = vld [vmem:[%s7 + $0x60] sm:$0xff]
    %v972 = vld [vmem:[%s7 + $0x68] sm:$0xff]
    %v973 = vld [vmem:[%s7 + $0x70] sm:$0xff]
    %v974 = vld [vmem:[%s7 + $0x78] sm:$0xff]
    %976 = vset.pattern.permute.xlu0 0
    %977 = vperm.xlu0 %976, %v959
    %v978 = vpop.permute.xlu0 %977
    %981 = vset.pattern.permute.xlu0 0
    %982 = vperm.xlu0 %981, %v960
    %v983 = vpop.permute.xlu0 %982
    %986 = vset.pattern.permute.xlu0 0
    %987 = vperm.xlu0 %986, %v961
    %v988 = vpop.permute.xlu0 %987
    %991 = vset.pattern.permute.xlu0 0
    %992 = vperm.xlu0 %991, %v962
    %v993 = vpop.permute.xlu0 %992
    %996 = vset.pattern.permute.xlu0 0
    %997 = vperm.xlu0 %996, %v963
    %v998 = vpop.permute.xlu0 %997
    %1001 = vset.pattern.permute.xlu0 0
    %1002 = vperm.xlu0 %1001, %v964
    %v1003 = vpop.permute.xlu0 %1002
    %1006 = vset.pattern.permute.xlu0 0
    %1007 = vperm.xlu0 %1006, %v965
    %v1008 = vpop.permute.xlu0 %1007
    %1011 = vset.pattern.permute.xlu0 0
    %1012 = vperm.xlu0 %1011, %v966
    %v1013 = vpop.permute.xlu0 %1012
    %1016 = vset.pattern.permute.xlu0 0
    %1017 = vperm.xlu0 %1016, %v967
    %v1018 = vpop.permute.xlu0 %1017
    %1021 = vset.pattern.permute.xlu0 0
    %1022 = vperm.xlu0 %1021, %v968
    %v1023 = vpop.permute.xlu0 %1022
    %1026 = vset.pattern.permute.xlu0 0
    %1027 = vperm.xlu0 %1026, %v969
    %v1028 = vpop.permute.xlu0 %1027
    %1031 = vset.pattern.permute.xlu0 0
    %1032 = vperm.xlu0 %1031, %v970
    %v1033 = vpop.permute.xlu0 %1032
    %1036 = vset.pattern.permute.xlu0 0
    %1037 = vperm.xlu0 %1036, %v971
    %v1038 = vpop.permute.xlu0 %1037
    %1041 = vset.pattern.permute.xlu0 0
    %1042 = vperm.xlu0 %1041, %v972
    %v1043 = vpop.permute.xlu0 %1042
    %1046 = vset.pattern.permute.xlu0 0
    %1047 = vperm.xlu0 %1046, %v973
    %v1048 = vpop.permute.xlu0 %1047
    %1051 = vset.pattern.permute.xlu0 0
    %1052 = vperm.xlu0 %1051, %v974
    %v1053 = vpop.permute.xlu0 %1052
    %v1055 = vmul.f32 %v943, %v978
    %v1056 = vmul.f32 %v944, %v983
    %v1057 = vmul.f32 %v945, %v988
    %v1058 = vmul.f32 %v946, %v993
    %v1059 = vmul.f32 %v947, %v998
    %v1060 = vmul.f32 %v948, %v1003
    %v1061 = vmul.f32 %v949, %v1008
    %v1062 = vmul.f32 %v950, %v1013
    %v1063 = vmul.f32 %v951, %v1018
    %v1064 = vmul.f32 %v952, %v1023
    %v1065 = vmul.f32 %v953, %v1028
    %v1066 = vmul.f32 %v954, %v1033
    %v1067 = vmul.f32 %v955, %v1038
    %v1068 = vmul.f32 %v956, %v1043
    %v1069 = vmul.f32 %v957, %v1048
    %v1070 = vmul.f32 %v958, %v1053
    %v1071 = vadd.f32 %v1055, %v1056
    %v1072 = vadd.f32 %v1071, %v1057
    %v1073 = vadd.f32 %v1072, %v1058
    %v1074 = vadd.f32 %v1073, %v1059
    %v1075 = vadd.f32 %v1074, %v1060
    %v1076 = vadd.f32 %v1075, %v1061
    %v1077 = vadd.f32 %v1076, %v1062
    %v1078 = vadd.f32 %v1077, %v1063
    %v1079 = vadd.f32 %v1078, %v1064
    %v1080 = vadd.f32 %v1079, %v1065
    %v1081 = vadd.f32 %v1080, %v1066
    %v1082 = vadd.f32 %v1081, %v1067
    %v1083 = vadd.f32 %v1082, %v1068
    %v1084 = vadd.f32 %v1083, %v1069
    %v1085 = vadd.f32 %v1084, %v1070
    %v1086 = vrot.slane %v1085, 4
    %v1087 = vadd.f32 %v1085, %v1086
    %v1088 = vrot.slane %v1087, 2
    %v1089 = vadd.f32 %v1087, %v1088
    %v1090 = vrot.slane %v1089, 1
    %v1091 = vadd.f32 %v1089, %v1090
    %s1092 = sld [smem:[#allocation2]]
    %v1093 = vstv %s1092
    %v1094 = vadd.f32 %v1091, %v1093
    %1095 = vst [vmem:[#allocation3] sm:$0x1] %v1094
    // Predicated region
    $region38: #{tpu_custom_call.1} parent=1 // pred_check
      _
    $region39: #{tpu_custom_call.1} parent=1 // pred_check_branch
      %1097 = sbr.rel (0) target = $region41
    $region40: #{tpu_custom_call.1} parent=1 // pred_region
      %s1099 = ssub.s32 16, 16
      %1100 = vsyncadd [#allocation4], %s1099
      %s1102 = sshll.u32 [#allocation3], 4
      %s1103 = int_to_ptr.vmem [resolvable:$true] %s1102
      %1105 = dma.vmem_to_hbm [thread:$0]  %s1103, 16, %s9, [#allocation4]
    $region41: #{tpu_custom_call.1} parent=1 // pred_fallthru
      _
    // Predicated region
    $region42: #{tpu_custom_call.1} parent=1 // pred_check
      _
    $region43: #{tpu_custom_call.1} parent=1 // pred_check_branch
      %1107 = sbr.rel (0) target = $region45
    $region44: #{tpu_custom_call.1} parent=1 // pred_region
      %1108 = dma.done [#allocation4], 16
    $region45: #{tpu_custom_call.1} parent=1 // pred_fallthru
      _
    %1109 = vsyncpa [#allocation4], 1

</llo_original>
